<compile_context>
chip_gen: v6e
topology: v6e:2x2x1
jax: 0.10.0
libtpu: 0.0.40
codegen_flags: <defaults>
</compile_context>

<pallas_src>
import functools

import jax
import jax.numpy as jnp
from jax import lax
from jax.experimental import pallas as pl
from jax.experimental.pallas import tpu as pltpu

ALPHA = 0.25
GAMMA = 2  # kernel hard-codes the square; asserted in the wrapper
EPS = 1e-8

_LANES = 128
_MAX_ROW_TILE = 2048   # 2048x128 f32 = 1 MiB per stream per buffer
_NUM_CORES = 2         # leading "parallel" axis -> both TensorCores on v7x


def _sublane_multiple(dtype):
    return {4: 8, 2: 16, 1: 32}.get(jnp.dtype(dtype).itemsize, 8)


def _focal_loss_kernel(x_ref, t_ref, o_ref, acc_ref, *,
                       row_tile, valid_rows, need_mask):
    i = pl.program_id(1)

    # Zero this core's single-vreg accumulator on its first row-block.
    @pl.when(i == 0)
    def _():
        acc_ref[...] = jnp.zeros_like(acc_ref)

    # Inputs arrive in their native dtype; upcast on the VPU here.
    x = x_ref[...].astype(jnp.float32)
    t = t_ref[...].astype(jnp.float32)

    pos = t >= 0.5
    # Probability assigned to the "correct" class for this element:
    #   pos -> x       (loss term uses (1-x)^2 * log(x))
    #   neg -> 1 - x   (loss term uses   x^2   * log(1-x))
    p_correct = jnp.where(pos, x, 1.0 - x)
    p_wrong = 1.0 - p_correct
    w = jnp.where(pos, jnp.float32(ALPHA), jnp.float32(1.0 - ALPHA))
    # gamma == 2 -> explicit square (cheap VPU); single log (EUP) per element.
    loss = (-w) * (p_wrong * p_wrong) * jnp.log(p_correct + jnp.float32(EPS))

    if need_mask:
        # Zero rows beyond the logical extent of the input (overhanging last
        # block and/or the phantom block of the second core).  Uses the
        # logical grid position, so it is independent of what was DMA'd.
        row_start = (pl.program_id(0) * pl.num_programs(1) + i) * row_tile
        row_ids = row_start + lax.broadcasted_iota(jnp.int32, loss.shape, 0)
        loss = jnp.where(row_ids < valid_rows, loss, 0.0)

    # (row_tile, 128) -> (row_tile//8, 8, 128), summed over the leading axis:
    # aligned-vreg VPU adds, then a single-vreg accumulator read-modify-write.
    acc_ref[...] += loss.reshape(row_tile // 8, 8, _LANES).sum(axis=0)

    # One cross-lane/sublane reduction + scalar SMEM store, last step only.
    @pl.when(i == pl.num_programs(1) - 1)
    def _():
        o_ref[0, 0] = jnp.sum(acc_ref[...])


def focal_loss(inputs, targets):
    """Mean focal loss over all elements (matches the PyTorch forward)."""
    assert inputs.shape == targets.shape
    assert GAMMA == 2, "kernel hard-codes gamma == 2 (explicit square)"
    n = inputs.size

    # Keep the native dtype on the HBM->VMEM stream (kernel upcasts to f32).
    x_flat = jnp.ravel(inputs)
    t_flat = jnp.ravel(targets)

    # Pad only up to the 128-lane boundary; (x=1, t=1) contributes exactly
    # zero loss.  Any further overhang is masked inside the kernel instead of
    # being materialized with a full jnp.pad copy.
    lane_pad = (-n) % _LANES
    if lane_pad:
        x_flat = jnp.pad(x_flat, (0, lane_pad), constant_values=1.0)
        t_flat = jnp.pad(t_flat, (0, lane_pad), constant_values=1.0)
    rows = (n + lane_pad) // _LANES

    sub = max(_sublane_multiple(x_flat.dtype), _sublane_multiple(t_flat.dtype))
    if rows <= _MAX_ROW_TILE:
        row_tile = max(sub, ((rows + sub - 1) // sub) * sub)
    else:
        row_tile = _MAX_ROW_TILE

    blocks = pl.cdiv(rows, row_tile)
    num_cores = _NUM_CORES if blocks >= _NUM_CORES else 1
    blocks_per_core = pl.cdiv(blocks, num_cores)
    total_blocks = num_cores * blocks_per_core
    need_mask = total_blocks * row_tile != rows

    x2 = x_flat.reshape(rows, _LANES)
    t2 = t_flat.reshape(rows, _LANES)

    if total_blocks == blocks:
        in_blk = pl.BlockSpec(
            (row_tile, _LANES), lambda c, i: (c * blocks_per_core + i, 0))
    else:
        # Clamp phantom block indices of the last core onto a valid block;
        # their contribution is zeroed by the in-kernel row mask.
        last_blk = blocks - 1
        in_blk = pl.BlockSpec(
            (row_tile, _LANES),
            lambda c, i: (jnp.minimum(c * blocks_per_core + i, last_blk), 0))

    kernel = functools.partial(
        _focal_loss_kernel,
        row_tile=row_tile,
        valid_rows=rows,
        need_mask=need_mask,
    )

    bytes_in = x2.size * x2.dtype.itemsize + t2.size * t2.dtype.itemsize
    cost = pl.CostEstimate(
        flops=10 * n, transcendentals=n, bytes_accessed=bytes_in + 4 * num_cores)

    partials = pl.pallas_call(
        kernel,
        out_shape=jax.ShapeDtypeStruct((num_cores, 1), jnp.float32),
        grid_spec=pltpu.PrefetchScalarGridSpec(
            num_scalar_prefetch=0,
            grid=(num_cores, blocks_per_core),
            in_specs=[in_blk, in_blk],
            out_specs=pl.BlockSpec(
                (1, 1), lambda c, i: (c, 0), memory_space=pltpu.SMEM),
            scratch_shapes=[pltpu.VMEM((8, _LANES), jnp.float32)],
        ),
        compiler_params=pltpu.CompilerParams(
            # Core axis shards across TensorCores on v7x; the row-block axis
            # carries the accumulator and must stay sequential.
            dimension_semantics=("parallel", "arbitrary"),
        ),
        cost_estimate=cost,
    )(x2, t2)

    return jnp.sum(partials) / jnp.float32(n)


if __name__ == "__main__":
    key = jax.random.PRNGKey(0)
    k1, k2 = jax.random.split(key)

    # NCHW, matching typical heatmap-style inputs to this loss.
    shape = (2, 4, 16, 16)
    # Predicted probabilities in (0, 1).
    inputs = jax.nn.sigmoid(jax.random.normal(k1, shape, dtype=jnp.float32))
    # Soft targets in [0, 1]; thresholded at 0.5 inside the loss.
    targets = jax.random.uniform(k2, shape, dtype=jnp.float32)

    out = focal_loss(inputs, targets)
    out = jax.block_until_ready(out)

    # Pure-JAX reference check (same math as the PyTorch module).
    pos = (targets >= 0.5).astype(jnp.float32)
    ref = jnp.mean(
        -pos * ALPHA * (1.0 - inputs) ** GAMMA * jnp.log(inputs + EPS)
        - (1.0 - pos) * (1.0 - ALPHA) * inputs ** GAMMA * jnp.log(1.0 - inputs + EPS)
    )
    assert jnp.allclose(out, ref, rtol=1e-5, atol=1e-6), (out, ref)

    print("KERNEL_OK")
</pallas_src>

<mosaic_0001>
module attributes {stable_mosaic.version = 11 : i64} {
  func.func @_focal_loss_kernel(%arg0: i32, %arg1: i32, %arg2: memref<16x128xf32, #tpu.memory_space<vmem>>, %arg3: memref<16x128xf32, #tpu.memory_space<vmem>>, %arg4: memref<1x1xf32, #tpu.memory_space<smem>>, %arg5: memref<8x128xf32, #tpu.memory_space<vmem>>) attributes {dimension_semantics = [#tpu.dimension_semantics<parallel>, #tpu.dimension_semantics<arbitrary>], iteration_bounds = array<i64: 1, 1>, scalar_prefetch = 0 : i64, scratch_operands = 1 : i64, tpu.core_type = #tpu.core_type<tc>, window_params = [{transform_indices = @transform_0, window_bounds = array<i64: 16, 128>}, {transform_indices = @transform_1, window_bounds = array<i64: 16, 128>}, {transform_indices = @transform_2, window_bounds = array<i64: 1, 1>}]} {
    %c0_i32 = arith.constant 0 : i32
    %0 = arith.cmpi eq, %arg1, %c0_i32 : i32
    %1 = arith.extui %0 : i1 to i32
    %c0_i32_0 = arith.constant 0 : i32
    %2 = arith.cmpi ne, %1, %c0_i32_0 : i32
    scf.if %2 {
      %cst_17 = arith.constant 0.000000e+00 : f32
      %31 = vector.broadcast %cst_17 : f32 to vector<8x128xf32>
      %c0_18 = arith.constant 0 : index
      %c0_19 = arith.constant 0 : index
      %32 = vector.load %arg5[%c0_18, %c0_19] : memref<8x128xf32, #tpu.memory_space<vmem>>, vector<8x128xf32>
      tpu.vector_store %arg5[%c0_18, %c0_19], %31 {strides = array<i32>} : memref<8x128xf32, #tpu.memory_space<vmem>>, vector<8x128xf32>,
    } else {
    }
    %c0 = arith.constant 0 : index
    %c0_1 = arith.constant 0 : index
    %3 = vector.load %arg2[%c0, %c0_1] : memref<16x128xf32, #tpu.memory_space<vmem>>, vector<16x128xf32>
    %c0_2 = arith.constant 0 : index
    %c0_3 = arith.constant 0 : index
    %4 = vector.load %arg3[%c0_2, %c0_3] : memref<16x128xf32, #tpu.memory_space<vmem>>, vector<16x128xf32>
    %cst = arith.constant 5.000000e-01 : f32
    %5 = vector.broadcast %cst : f32 to vector<16x128xf32>
    %6 = arith.cmpf oge, %4, %5 : vector<16x128xf32>
    %cst_4 = arith.constant 1.000000e+00 : f32
    %7 = vector.broadcast %cst_4 : f32 to vector<16x128xf32>
    %8 = arith.subf %7, %3 : vector<16x128xf32>
    %9 = arith.select %6, %3, %8 : vector<16x128xi1>, vector<16x128xf32>
    %cst_5 = arith.constant 1.000000e+00 : f32
    %10 = vector.broadcast %cst_5 : f32 to vector<16x128xf32>
    %11 = arith.subf %10, %9 : vector<16x128xf32>
    %cst_6 = arith.constant 2.500000e-01 : f32
    %cst_7 = arith.constant 7.500000e-01 : f32
    %12 = vector.broadcast %cst_6 : f32 to vector<16x128xf32>
    %13 = vector.broadcast %cst_7 : f32 to vector<16x128xf32>
    %14 = arith.select %6, %12, %13 : vector<16x128xi1>, vector<16x128xf32>
    %cst_8 = arith.constant 0.000000e+00 : f32
    %15 = vector.broadcast %cst_8 : f32 to vector<16x128xf32>
    %16 = arith.subf %15, %14 : vector<16x128xf32>
    %17 = arith.mulf %11, %11 : vector<16x128xf32>
    %18 = arith.mulf %16, %17 : vector<16x128xf32>
    %cst_9 = arith.constant 9.99999993E-9 : f32
    %19 = vector.broadcast %cst_9 : f32 to vector<16x128xf32>
    %20 = arith.addf %9, %19 : vector<16x128xf32>
    %21 = math.log %20 : vector<16x128xf32>
    %22 = arith.mulf %18, %21 : vector<16x128xf32>
    %c0_10 = arith.constant 0 : index
    %c0_11 = arith.constant 0 : index
    %23 = vector.load %arg5[%c0_10, %c0_11] : memref<8x128xf32, #tpu.memory_space<vmem>>, vector<8x128xf32>
    %24 = vector.shape_cast %22 : vector<16x128xf32> to vector<2x8x128xf32>
    %cst_12 = arith.constant dense<0.000000e+00> : vector<8x128xf32>
    %25 = vector.multi_reduction <add>, %24, %cst_12 [0] : vector<2x8x128xf32> to vector<8x128xf32>
    %26 = arith.addf %23, %25 : vector<8x128xf32>
    %c0_13 = arith.constant 0 : index
    %c0_14 = arith.constant 0 : index
    %27 = vector.load %arg5[%c0_13, %c0_14] : memref<8x128xf32, #tpu.memory_space<vmem>>, vector<8x128xf32>
    tpu.vector_store %arg5[%c0_13, %c0_14], %26 {strides = array<i32>} : memref<8x128xf32, #tpu.memory_space<vmem>>, vector<8x128xf32>,
    %c0_i32_15 = arith.constant 0 : i32
    %28 = arith.cmpi eq, %arg1, %c0_i32_15 : i32
    %29 = arith.extui %28 : i1 to i32
    %c0_i32_16 = arith.constant 0 : i32
    %30 = arith.cmpi ne, %29, %c0_i32_16 : i32
    scf.if %30 {
      %c0_17 = arith.constant 0 : index
      %c0_18 = arith.constant 0 : index
      %31 = vector.load %arg5[%c0_17, %c0_18] : memref<8x128xf32, #tpu.memory_space<vmem>>, vector<8x128xf32>
      %32 = vector.shape_cast %31 : vector<8x128xf32> to vector<1x8x128xf32>
      %cst_19 = arith.constant dense<0.000000e+00> : vector<1xf32>
      %33 = vector.multi_reduction <add>, %32, %cst_19 [1, 2] : vector<1x8x128xf32> to vector<1xf32>
      %34 = vector.shape_cast %33 : vector<1xf32> to vector<1x1x1xf32>
      %35 = vector.extract %34[0, 0, 0] : f32 from vector<1x1x1xf32>
      %c0_20 = arith.constant 0 : index
      %c0_21 = arith.constant 0 : index
      %36 = memref.load %arg4[%c0_20, %c0_21] : memref<1x1xf32, #tpu.memory_space<smem>>
      memref.store %35, %arg4[%c0_20, %c0_21] : memref<1x1xf32, #tpu.memory_space<smem>>
    } else {
    }
    return
  }
  func.func @transform_0(%arg0: i32, %arg1: i32) -> (i32, i32) {
    %c1_i32 = arith.constant 1 : i32
    %0 = arith.muli %arg0, %c1_i32 : i32
    %1 = arith.addi %0, %arg1 : i32
    %c0_i32 = arith.constant 0 : i32
    %c0_i32_0 = arith.constant 0 : i32
    return %1, %c0_i32 : i32, i32
  }
  func.func @transform_1(%arg0: i32, %arg1: i32) -> (i32, i32) {
    %c1_i32 = arith.constant 1 : i32
    %0 = arith.muli %arg0, %c1_i32 : i32
    %1 = arith.addi %0, %arg1 : i32
    %c0_i32 = arith.constant 0 : i32
    %c0_i32_0 = arith.constant 0 : i32
    return %1, %c0_i32 : i32, i32
  }
  func.func @transform_2(%arg0: i32, %arg1: i32) -> (i32, i32) {
    %c0_i32 = arith.constant 0 : i32
    %c0_i32_0 = arith.constant 0 : i32
    return %arg0, %c0_i32 : i32, i32
  }
}

</mosaic_0001>

<llo_original>
// kernel: tpu_custom_call.1
$region0: #{tpu_custom_call.1}
  #allocation0 [shape = 'u32[]', space=smem, size = 0x4, offset = 0x4, fixed_abs, tag = 'smem constant byte address 0x4 - core index']
  #allocation1 [shape = 'u32[144,128]{1,0:T(1,128)}', space=vmem, size = 0x12000, scoped, tag = 'internal scratch']
  #allocation2 [shape = 'f32[8,128]{1,0:T(8,128)}', space=vmem, size = 0x1000, scoped, tag = 'scratch operand']
  %s0 = inlined_call_operand.hbm [shape: f32[16,128], index: 0, kind: input, shape index: {}]
  %s1 = inlined_call_operand.hbm [shape: f32[16,128], index: 1, kind: input, shape index: {}]
  %s2 = inlined_call_operand.hbm [shape: f32[1,1], index: 2, kind: output, shape index: {}]
  %s3 = sld [smem:[#allocation0]]
  $region34: #{tpu_custom_call.1} parent=0
    _
  %s5 = ssub.s32 1, %s3
  %s6 = scalar_select 0, %s5, %s3
  $region1: #{tpu_custom_call.1} parent=0
    #allocation3 [shape = 'u8[8192]{0}', space=vmem, size = 0x2000, scoped, tag = 'input window, operand 0, single buffered']
    #allocation4 [shape = 's32[1]{0}', space=sflag, size = 0x4, scoped, tag = 'scoped memory for tpu_custom_call.1']
    #allocation5 [shape = 's32[1]{0}', space=sflag, size = 0x4, scoped, tag = 'scoped memory for tpu_custom_call.1']
    #allocation6 [shape = 'u8[8192]{0}', space=vmem, size = 0x2000, scoped, tag = 'input window, operand 1, single buffered']
    #allocation7 [shape = 's32[1]{0}', space=sflag, size = 0x4, scoped, tag = 'scoped memory for tpu_custom_call.1']
    #allocation8 [shape = 'u8[512]{0}', space=smem, size = 0x200, scoped, tag = 'output window, operand 0, single buffered']
    %7 = vsyncpa [#allocation4], 0
    %8 = vsyncpa [#allocation7], 0
    %9 = vsyncpa [#allocation5], 0
    // Predicated region
    $region2: #{tpu_custom_call.1} parent=1 // pred_check
      _
    $region3: #{tpu_custom_call.1} parent=1 // pred_check_branch
      %11 = sbr.rel (0) target = $region5
    $region4: #{tpu_custom_call.1} parent=1 // pred_region
      %s12 = sadd.s32 0, 0
      %s13 = smul.u32 2, %s12
      %s15 = ssub.s32 256, 256
      %16 = vsyncadd [#allocation4], %s15
      %s17 = smul.addr %s13, 128
      %s18 = scalar_lea.hbm %s0, %s17
      %s19 = sshll.u32 [#allocation3], 4
      %s20 = int_to_ptr.vmem [resolvable:$true] %s19
      %25 = dma.hbm_to_vmem [thread:$0]  %s18, 256, %s20, [#allocation4], 128, 128, 8
    $region5: #{tpu_custom_call.1} parent=1 // pred_fallthru
      _
    // Predicated region
    $region6: #{tpu_custom_call.1} parent=1 // pred_check
      _
    $region7: #{tpu_custom_call.1} parent=1 // pred_check_branch
      %27 = sbr.rel (0) target = $region9
    $region8: #{tpu_custom_call.1} parent=1 // pred_region
      %s28 = sadd.s32 0, 0
      %s29 = smul.u32 2, %s28
      %s31 = ssub.s32 256, 256
      %32 = vsyncadd [#allocation7], %s31
      %s33 = smul.addr %s29, 128
      %s34 = scalar_lea.hbm %s1, %s33
      %s35 = sshll.u32 [#allocation6], 4
      %s36 = int_to_ptr.vmem [resolvable:$true] %s35
      %41 = dma.hbm_to_vmem [thread:$0]  %s34, 256, %s36, [#allocation7], 128, 128, 8
    $region9: #{tpu_custom_call.1} parent=1 // pred_fallthru
      _
    // Predicated region
    $region10: #{tpu_custom_call.1} parent=1 // pred_check
      _
    $region11: #{tpu_custom_call.1} parent=1 // pred_check_branch
      %43 = sbr.rel (0) target = $region13
    $region12: #{tpu_custom_call.1} parent=1 // pred_region
      %44 = dma.done [#allocation4], 256
    $region13: #{tpu_custom_call.1} parent=1 // pred_fallthru
      _
    // Predicated region
    $region14: #{tpu_custom_call.1} parent=1 // pred_check
      _
    $region15: #{tpu_custom_call.1} parent=1 // pred_check_branch
      %46 = sbr.rel (0) target = $region17
    $region16: #{tpu_custom_call.1} parent=1 // pred_region
      %47 = dma.done [#allocation7], 256
    $region17: #{tpu_custom_call.1} parent=1 // pred_fallthru
      _
    %s48 = sadd.s32 0, 0
    %s49 = smul.u32 2, %s48
    %s50 = sadd.s32 0, 0
    %s51 = smul.u32 2, %s50
    %p52 = scmp.eq.s32.totalorder 0, 0
    // Predicated region
    $region18: #{tpu_custom_call.1} parent=1 // pred_check
      %p53 = pneg %p52
    $region19: #{tpu_custom_call.1} parent=1 // pred_check_branch
      %55 = sbr.rel (%p53) target = $region21
    $region20: #{tpu_custom_call.1} parent=1 // pred_region
      %56 = vst [vmem:[#allocation2] sm:$0xff] 0.0
    $region21: #{tpu_custom_call.1} parent=1 // pred_fallthru
      _
    %v57 = vld [vmem:[#allocation3] sm:$0xff]
    %v58 = vld [vmem:[#allocation3 + $0x8] sm:$0xff]
    %v59 = vld [vmem:[#allocation6] sm:$0xff]
    %v60 = vld [vmem:[#allocation6 + $0x8] sm:$0xff]
    %vm61 = vcmp.ge.f32.partialorder %v59, 0.5
    %vm62 = vcmp.ge.f32.partialorder %v60, 0.5
    %v63 = vsub.f32 1.0, %v57
    %v64 = vsub.f32 1.0, %v58
    %v65 = vsel %vm61, %v57, %v63
    %v66 = vsel %vm62, %v58, %v64
    %v67 = vsub.f32 1.0, %v65
    %v68 = vsub.f32 1.0, %v66
    %v69 = vsel %vm61, 0.25, 0.75
    %v70 = vsel %vm62, 0.25, 0.75
    %v71 = vsub.f32 0.0, %v69
    %v72 = vsub.f32 0.0, %v70
    %v73 = vmul.f32 %v67, %v67
    %v74 = vmul.f32 %v68, %v68
    %v75 = vmul.f32 %v71, %v73
    %v76 = vmul.f32 %v72, %v74
    %v77 = vadd.f32 %v65, 1e-08
    %v78 = vadd.f32 %v66, 1e-08
    %v79 = vlog2.pop %v77
    %v80 = vmul.f32 %v79, 0.6931472
    %v81 = vlog2.pop %v78
    %v82 = vmul.f32 %v81, 0.6931472
    %v83 = vmul.f32 %v75, %v80
    %v84 = vmul.f32 %v76, %v82
    %v85 = vld [vmem:[#allocation2] sm:$0xff]
    %v86 = vadd.f32 %v83, %v84
    %v87 = vadd.f32 %v85, %v86
    %88 = vst [vmem:[#allocation2] sm:$0xff] %v87
    // Predicated region
    $region22: #{tpu_custom_call.1} parent=1 // pred_check
      %p89 = pneg %p52
    $region23: #{tpu_custom_call.1} parent=1 // pred_check_branch
      %91 = sbr.rel (%p89) target = $region25
    $region24: #{tpu_custom_call.1} parent=1 // pred_region
      %v92 = vld [vmem:[#allocation2] sm:$0xff]
      %93 = vadd.xlane.f32.xlu0 %v92
      %v94 = vpop.xlane.xlu0 %93
      %v95 = vrot.slane %v94, 4
      %v96 = vadd.f32 %v94, %v95
      %v97 = vrot.slane %v96, 2
      %v98 = vadd.f32 %v96, %v97
      %v99 = vrot.slane %v98, 1
      %v100 = vadd.f32 %v98, %v99
      %s101 = vtos %v100
      %s102 = scalar_lea.smem [#allocation8], 0
      %103 = sst [smem:[%s102]] %s101
    $region25: #{tpu_custom_call.1} parent=1 // pred_fallthru
      _
    // Predicated region
    $region26: #{tpu_custom_call.1} parent=1 // pred_check
      _
    $region27: #{tpu_custom_call.1} parent=1 // pred_check_branch
      %105 = sbr.rel (0) target = $region29
    $region28: #{tpu_custom_call.1} parent=1 // pred_region
      %s107 = ssub.s32 16, 16
      %108 = vsyncadd [#allocation5], %s107
      %111 = dma.smem_to_hbm [#allocation8], 16, %s2, [#allocation5]
    $region29: #{tpu_custom_call.1} parent=1 // pred_fallthru
      _
    // Predicated region
    $region30: #{tpu_custom_call.1} parent=1 // pred_check
      _
    $region31: #{tpu_custom_call.1} parent=1 // pred_check_branch
      %113 = sbr.rel (0) target = $region33
    $region32: #{tpu_custom_call.1} parent=1 // pred_region
      %114 = dma.done [#allocation5], 16
    $region33: #{tpu_custom_call.1} parent=1 // pred_fallthru
      _
    %115 = sfence
    %116 = vsyncpa [#allocation4], 1
    %117 = vsyncpa [#allocation7], 1
    %118 = vsyncpa [#allocation5], 1

</llo_original>
